<compile_context>
chip_gen: v7x
topology: tpu7x:2x2x1
jax: 0.10.0
libtpu: 0.0.40
codegen_flags: <defaults>
</compile_context>

<pallas_src>
import numpy as np
import jax
import jax.numpy as jnp
from jax.experimental import pallas as pl
from jax.experimental.pallas import tpu as pltpu

INIT_SCALE = 0.01


def _round_up(n, m):
    return (n + m - 1) // m * m


def _mlp_kernel(x_ref, w1_ref, w2_ref, o_ref, y_ref):
    # x_ref : bf16 (2, bm, Wp)   plane 0 = real rows, plane 1 = imag rows
    # w1_ref: bf16 (Wp, Hp)      real weights, zero padded, VMEM resident
    # w2_ref: bf16 (Hp, Wp)
    # o_ref : f32  (2, bm, Wp)
    # y_ref : bf16 (2, bm, Hp)   scratch holding the gated activation
    _, bm, wp = x_ref.shape
    hp = w1_ref.shape[1]

    # ---- layer 1: one fused MXU matmul for both planes (W1 is real).
    # The reshape is layout-free row stacking (no copy, unlike concatenate).
    x = x_ref[...].reshape(2 * bm, wp)
    z = jnp.dot(x, w1_ref[...], preferred_element_type=jnp.float32)
    z = z.reshape(2, bm, hp)
    zr = z[0]
    zi = z[1]

    # ---- complex SiLU: y = z / (1 + exp(-z)), elementwise in f32 ----------
    # exp(-z) = exp(-zr) * (cos zi - i sin zi).  Clamp the exponent so exp()
    # never overflows f32; for zr < -40 the gate output is ~0 anyway and the
    # clamped denominator magnitude stays ~e^80 << f32 max.
    mag = jnp.exp(jnp.minimum(-zr, 40.0))
    dr = 1.0 + mag * jnp.cos(zi)                          # Re(1 + exp(-z))
    di = -mag * jnp.sin(zi)                               # Im(1 + exp(-z))
    inv_den = pl.reciprocal(dr * dr + di * di, approx=True)   # EUP vrcp
    # y = z * conj(den) / |den|^2 written straight into the bf16 scratch that
    # feeds the second matmul (no f32 concatenate / extra materialization).
    y_ref[0] = ((zr * dr + zi * di) * inv_den).astype(y_ref.dtype)
    y_ref[1] = ((zi * dr - zr * di) * inv_den).astype(y_ref.dtype)

    # ---- layer 2: one fused MXU matmul for both planes (W2 is real) -------
    o = jnp.dot(y_ref[...].reshape(2 * bm, hp), w2_ref[...],
                preferred_element_type=jnp.float32)
    o_ref[...] = o.reshape(2, bm, wp)


def prepare_mlp_params(w1, w2):
    """Pad + cast the (real) weights once, outside the per-call path."""
    w, h = w1.shape
    wp, hp = _round_up(w, 128), _round_up(h, 128)
    w1b = w1.astype(jnp.bfloat16)
    w2b = w2.astype(jnp.bfloat16)
    if (w, h) == (wp, hp):
        return w1b, w2b
    w1p = jnp.zeros((wp, hp), jnp.bfloat16).at[:w, :h].set(w1b)
    w2p = jnp.zeros((hp, wp), jnp.bfloat16).at[:h, :w].set(w2b)
    return w1p, w2p


def mlp_forward(x_complex, w1p, w2p, *, block_m=None):
    """x_complex: complex64 [M, W]; w1p/w2p: prepared (padded bf16) weights."""
    wp, hp = w1p.shape
    m, w = x_complex.shape
    xr = jnp.real(x_complex).astype(jnp.bfloat16)
    xi = jnp.imag(x_complex).astype(jnp.bfloat16)

    if block_m is None:
        # Cap the M tile for very wide models: per-step f32 intermediates are
        # ~2*bm*Hp*4 bytes each, which matters on v7x's 64 MiB VMEM.
        block_m = 256 if hp <= 6144 else 128

    m8 = _round_up(m, 8)
    if m8 <= 16:
        bm = m8                       # tiny problems: single tile
    elif m8 <= 2 * block_m:
        # >=2 grid steps so the "parallel" axis feeds both v7x TensorCores;
        # keep tiles multiples of 16 (bf16 sublane pack -> layout-free reshapes)
        bm = min(block_m, _round_up(pl.cdiv(m8, 2), 16))
    else:
        bm = block_m
    mp = _round_up(m8, bm)

    # Lane-dense packing; skip the pad-via-scatter copy when not needed.
    if m == mp and w == wp:
        x_packed = jnp.stack([xr, xi], axis=0)
    else:
        x_packed = jnp.zeros((2, mp, wp), jnp.bfloat16)
        x_packed = x_packed.at[0, :m, :w].set(xr)
        x_packed = x_packed.at[1, :m, :w].set(xi)

    # VMEM budget: resident weights (single-buffered) + double-buffered x/out
    # blocks + f32 elementwise intermediates; clamped to be generation-safe.
    vmem_bytes = (
        2 * wp * hp * 2                  # both bf16 weight matrices
        + 2 * (2 * bm * wp) * 2          # x blocks (bf16, double-buffered)
        + 2 * (2 * bm * wp) * 4          # out blocks (f32, double-buffered)
        + (2 * bm * hp) * (2 + 8 * 4)    # y scratch + f32 intermediates
    )
    vmem_limit = int(min(max(2 * vmem_bytes, 32 << 20), 64 << 20))

    cost = pl.CostEstimate(
        flops=4 * (2 * mp) * wp * hp,            # two matmuls, 2*M*K*N each
        transcendentals=3 * mp * hp,             # exp, cos, sin per hidden elem
        bytes_accessed=(2 * mp * wp * 2          # x (bf16)
                        + 2 * wp * hp * 2        # W1 + W2 (bf16)
                        + 2 * mp * wp * 4),      # out (f32)
    )

    out = pl.pallas_call(
        _mlp_kernel,
        out_shape=jax.ShapeDtypeStruct((2, mp, wp), jnp.float32),
        grid=(mp // bm,),
        in_specs=[
            pl.BlockSpec((2, bm, wp), lambda i: (0, i, 0)),   # x, tiled over M
            # constant index_map -> single buffer; double buffering would only
            # double the resident weight VMEM.
            pl.BlockSpec((wp, hp), lambda i: (0, 0),
                         pipeline_mode=pl.Buffered(1)),
            pl.BlockSpec((hp, wp), lambda i: (0, 0),
                         pipeline_mode=pl.Buffered(1)),
        ],
        out_specs=pl.BlockSpec((2, bm, wp), lambda i: (0, i, 0)),
        scratch_shapes=[pltpu.VMEM((2, bm, hp), jnp.bfloat16)],
        compiler_params=pltpu.CompilerParams(
            dimension_semantics=("parallel",),   # shards M across v7x's 2 TCs
            vmem_limit_bytes=vmem_limit,
        ),
        cost_estimate=cost,
    )(x_packed, w1p, w2p)

    out = out[:, :m, :w]
    return jax.lax.complex(out[0], out[1])


if __name__ == "__main__":
    width = 32
    M = 8  # rows ("tokens"); at this toy size the kernel is pure launch overhead

    key = jax.random.PRNGKey(0)
    k1, k2, k3, k4 = jax.random.split(key, 4)

    # deterministic parameter init (matches shapes in MLP.__init__)
    w1 = jax.random.normal(k1, (width, width * 4), dtype=jnp.float32) * INIT_SCALE
    w2 = jax.random.normal(k2, (width * 4, width), dtype=jnp.float32) * INIT_SCALE

    # complex input x
    xr = jax.random.normal(k3, (M, width), dtype=jnp.float32)
    xi = jax.random.normal(k4, (M, width), dtype=jnp.float32)
    x = jax.lax.complex(xr, xi)

    w1p, w2p = prepare_mlp_params(w1, w2)   # hoisted out of the forward path
    out = jax.block_until_ready(mlp_forward(x, w1p, w2p))

    # host-side numpy reference (complex128); tolerance sized for bf16 matmul
    # operands with f32 accumulation plus the approx reciprocal.
    xn = np.asarray(xr, np.float64) + 1j * np.asarray(xi, np.float64)
    zn = xn @ np.asarray(w1, np.float64)
    yn = zn / (1.0 + np.exp(-zn))
    on = yn @ np.asarray(w2, np.float64)
    np.testing.assert_allclose(np.asarray(out), on.astype(np.complex64),
                               rtol=5e-2, atol=5e-4)

    print("KERNEL_OK")
</pallas_src>

<mosaic_0001>
module attributes {stable_mosaic.version = 11 : i64} {
  func.func @_mlp_kernel(%arg0: i32, %arg1: memref<2x8x128xbf16, #tpu.memory_space<vmem>>, %arg2: memref<128x128xbf16, #tpu.memory_space<vmem>>, %arg3: memref<128x128xbf16, #tpu.memory_space<vmem>>, %arg4: memref<2x8x128xf32, #tpu.memory_space<vmem>>, %arg5: memref<2x8x128xbf16, #tpu.memory_space<vmem>>) attributes {dimension_semantics = [#tpu.dimension_semantics<parallel>], iteration_bounds = array<i64: 1>, scalar_prefetch = 0 : i64, scratch_operands = 1 : i64, tpu.core_type = #tpu.core_type<tc>, window_params = [{transform_indices = @transform_0, window_bounds = array<i64: 2, 8, 128>}, {pipeline_mode = #tpu.pipeline_mode<synchronous>, transform_indices = @transform_1, window_bounds = array<i64: 128, 128>}, {pipeline_mode = #tpu.pipeline_mode<synchronous>, transform_indices = @transform_2, window_bounds = array<i64: 128, 128>}, {transform_indices = @transform_3, window_bounds = array<i64: 2, 8, 128>}]} {
    %c0 = arith.constant 0 : index
    %c0_0 = arith.constant 0 : index
    %c0_1 = arith.constant 0 : index
    %0 = vector.load %arg1[%c0, %c0_0, %c0_1] : memref<2x8x128xbf16, #tpu.memory_space<vmem>>, vector<2x8x128xbf16>
    %1 = vector.shape_cast %0 : vector<2x8x128xbf16> to vector<16x128xbf16>
    %c0_2 = arith.constant 0 : index
    %c0_3 = arith.constant 0 : index
    %2 = vector.load %arg2[%c0_2, %c0_3] : memref<128x128xbf16, #tpu.memory_space<vmem>>, vector<128x128xbf16>
    %cst = arith.constant dense<0.000000e+00> : vector<16x128xf32>
    %3 = tpu.matmul %1, %2, %cst {dimension_numbers = #tpu.dot_dimension_numbers<[1], [0], [0], [1], [0, 0, 1, 1], [], []>} : vector<16x128xbf16>, vector<128x128xbf16>, vector<16x128xf32> -> vector<16x128xf32>
    %4 = vector.shape_cast %3 : vector<16x128xf32> to vector<2x8x128xf32>
    %5 = vector.extract_strided_slice %4 {offsets = [0, 0, 0], sizes = [1, 8, 128], strides = [1, 1, 1]} : vector<2x8x128xf32> to vector<1x8x128xf32>
    %6 = vector.shape_cast %5 : vector<1x8x128xf32> to vector<8x128xf32>
    %7 = vector.extract_strided_slice %4 {offsets = [1, 0, 0], sizes = [1, 8, 128], strides = [1, 1, 1]} : vector<2x8x128xf32> to vector<1x8x128xf32>
    %8 = vector.shape_cast %7 : vector<1x8x128xf32> to vector<8x128xf32>
    %cst_4 = arith.constant 0.000000e+00 : f32
    %9 = vector.broadcast %cst_4 : f32 to vector<8x128xf32>
    %10 = arith.subf %9, %6 : vector<8x128xf32>
    %cst_5 = arith.constant 4.000000e+01 : f32
    %11 = vector.broadcast %cst_5 : f32 to vector<8x128xf32>
    %12 = arith.minimumf %10, %11 : vector<8x128xf32>
    %13 = math.exp %12 : vector<8x128xf32>
    %14 = math.cos %8 : vector<8x128xf32>
    %15 = arith.mulf %13, %14 : vector<8x128xf32>
    %cst_6 = arith.constant 1.000000e+00 : f32
    %16 = vector.broadcast %cst_6 : f32 to vector<8x128xf32>
    %17 = arith.addf %16, %15 : vector<8x128xf32>
    %cst_7 = arith.constant 0.000000e+00 : f32
    %18 = vector.broadcast %cst_7 : f32 to vector<8x128xf32>
    %19 = arith.subf %18, %13 : vector<8x128xf32>
    %20 = math.sin %8 : vector<8x128xf32>
    %21 = arith.mulf %19, %20 : vector<8x128xf32>
    %22 = arith.mulf %17, %17 : vector<8x128xf32>
    %23 = arith.mulf %21, %21 : vector<8x128xf32>
    %24 = arith.addf %22, %23 : vector<8x128xf32>
    %25 = tpu.reciprocal %24 {approx = true} : vector<8x128xf32> -> vector<8x128xf32>
    %26 = arith.mulf %6, %17 : vector<8x128xf32>
    %27 = arith.mulf %8, %21 : vector<8x128xf32>
    %28 = arith.addf %26, %27 : vector<8x128xf32>
    %29 = arith.mulf %28, %25 : vector<8x128xf32>
    %30 = arith.truncf %29 : vector<8x128xf32> to vector<8x128xbf16>
    %c0_8 = arith.constant 0 : index
    %c0_9 = arith.constant 0 : index
    %c0_10 = arith.constant 0 : index
    %31 = vector.load %arg5[%c0_8, %c0_9, %c0_10] : memref<2x8x128xbf16, #tpu.memory_space<vmem>>, vector<1x8x128xbf16>
    %32 = vector.shape_cast %31 : vector<1x8x128xbf16> to vector<8x128xbf16>
    %33 = vector.shape_cast %30 : vector<8x128xbf16> to vector<1x8x128xbf16>
    tpu.vector_store %arg5[%c0_8, %c0_9, %c0_10], %33 {strides = array<i32>} : memref<2x8x128xbf16, #tpu.memory_space<vmem>>, vector<1x8x128xbf16>,
    %34 = arith.mulf %8, %17 : vector<8x128xf32>
    %35 = arith.mulf %6, %21 : vector<8x128xf32>
    %36 = arith.subf %34, %35 : vector<8x128xf32>
    %37 = arith.mulf %36, %25 : vector<8x128xf32>
    %38 = arith.truncf %37 : vector<8x128xf32> to vector<8x128xbf16>
    %c1 = arith.constant 1 : index
    %c0_11 = arith.constant 0 : index
    %c0_12 = arith.constant 0 : index
    %39 = vector.load %arg5[%c1, %c0_11, %c0_12] : memref<2x8x128xbf16, #tpu.memory_space<vmem>>, vector<1x8x128xbf16>
    %40 = vector.shape_cast %39 : vector<1x8x128xbf16> to vector<8x128xbf16>
    %41 = vector.shape_cast %38 : vector<8x128xbf16> to vector<1x8x128xbf16>
    tpu.vector_store %arg5[%c1, %c0_11, %c0_12], %41 {strides = array<i32>} : memref<2x8x128xbf16, #tpu.memory_space<vmem>>, vector<1x8x128xbf16>,
    %c0_13 = arith.constant 0 : index
    %c0_14 = arith.constant 0 : index
    %c0_15 = arith.constant 0 : index
    %42 = vector.load %arg5[%c0_13, %c0_14, %c0_15] : memref<2x8x128xbf16, #tpu.memory_space<vmem>>, vector<2x8x128xbf16>
    %43 = vector.shape_cast %42 : vector<2x8x128xbf16> to vector<16x128xbf16>
    %c0_16 = arith.constant 0 : index
    %c0_17 = arith.constant 0 : index
    %44 = vector.load %arg3[%c0_16, %c0_17] : memref<128x128xbf16, #tpu.memory_space<vmem>>, vector<128x128xbf16>
    %cst_18 = arith.constant dense<0.000000e+00> : vector<16x128xf32>
    %45 = tpu.matmul %43, %44, %cst_18 {dimension_numbers = #tpu.dot_dimension_numbers<[1], [0], [0], [1], [0, 0, 1, 1], [], []>} : vector<16x128xbf16>, vector<128x128xbf16>, vector<16x128xf32> -> vector<16x128xf32>
    %46 = vector.shape_cast %45 : vector<16x128xf32> to vector<2x8x128xf32>
    %c0_19 = arith.constant 0 : index
    %c0_20 = arith.constant 0 : index
    %c0_21 = arith.constant 0 : index
    %47 = vector.load %arg4[%c0_19, %c0_20, %c0_21] : memref<2x8x128xf32, #tpu.memory_space<vmem>>, vector<2x8x128xf32>
    tpu.vector_store %arg4[%c0_19, %c0_20, %c0_21], %46 {strides = array<i32>} : memref<2x8x128xf32, #tpu.memory_space<vmem>>, vector<2x8x128xf32>,
    return
  }
  func.func @transform_0(%arg0: i32) -> (i32, i32, i32) {
    %c0_i32 = arith.constant 0 : i32
    %c0_i32_0 = arith.constant 0 : i32
    %c0_i32_1 = arith.constant 0 : i32
    return %c0_i32, %arg0, %c0_i32_0 : i32, i32, i32
  }
  func.func @transform_1(%arg0: i32) -> (i32, i32) {
    %c0_i32 = arith.constant 0 : i32
    %c0_i32_0 = arith.constant 0 : i32
    %c0_i32_1 = arith.constant 0 : i32
    return %c0_i32, %c0_i32_0 : i32, i32
  }
  func.func @transform_2(%arg0: i32) -> (i32, i32) {
    %c0_i32 = arith.constant 0 : i32
    %c0_i32_0 = arith.constant 0 : i32
    %c0_i32_1 = arith.constant 0 : i32
    return %c0_i32, %c0_i32_0 : i32, i32
  }
  func.func @transform_3(%arg0: i32) -> (i32, i32, i32) {
    %c0_i32 = arith.constant 0 : i32
    %c0_i32_0 = arith.constant 0 : i32
    %c0_i32_1 = arith.constant 0 : i32
    return %c0_i32, %arg0, %c0_i32_0 : i32, i32, i32
  }
}

</mosaic_0001>

<llo_original>
// kernel: tpu_custom_call.1
$region0: #{tpu_custom_call.1}
  #allocation0 [shape = 'u32[]', space=smem, size = 0x4, offset = 0x4, fixed_abs, tag = 'smem constant byte address 0x4 - core index']
  #allocation1 [shape = 'u32[144,128]{1,0:T(1,128)}', space=vmem, size = 0x12000, scoped, tag = 'internal scratch']
  #allocation2 [shape = 'bf16[2,8,128]{2,1,0:T(8,128)(2,1)}', space=vmem, size = 0x1000, scoped, tag = 'scratch operand']
  %s0 = inlined_call_operand.hbm [shape: bf16[2,8,128], index: 0, kind: input, shape index: {}]
  %s1 = inlined_call_operand.hbm [shape: bf16[128,128], index: 1, kind: input, shape index: {}]
  %s2 = inlined_call_operand.hbm [shape: bf16[128,128], index: 2, kind: input, shape index: {}]
  %s3 = inlined_call_operand.hbm [shape: f32[2,8,128], index: 3, kind: output, shape index: {}]
  %s4 = sld [smem:[#allocation0]]
  $region34: #{tpu_custom_call.1} parent=0
    _
  %s6 = ssub.s32 1, %s4
  %s7 = scalar_select 0, %s6, %s4
  $region1: #{tpu_custom_call.1} parent=0
    #allocation3 [shape = 'u8[4096]{0}', space=vmem, size = 0x1000, scoped, tag = 'input window, operand 0, single buffered']
    #allocation4 [shape = 's32[1]{0}', space=sflag, size = 0x4, scoped, tag = 'scoped memory for tpu_custom_call.1']
    #allocation5 [shape = 's32[1]{0}', space=sflag, size = 0x4, scoped, tag = 'scoped memory for tpu_custom_call.1']
    #allocation6 [shape = 'u8[32768]{0}', space=vmem, size = 0x8000, scoped, tag = 'input window, operand 1, single buffered']
    #allocation7 [shape = 's32[1]{0}', space=sflag, size = 0x4, scoped, tag = 'scoped memory for tpu_custom_call.1']
    #allocation8 [shape = 'u8[32768]{0}', space=vmem, size = 0x8000, scoped, tag = 'input window, operand 2, single buffered']
    #allocation9 [shape = 'u8[8192]{0}', space=vmem, size = 0x2000, scoped, tag = 'output window, operand 0, single buffered']
    %8 = vsyncpa [#allocation4], 0
    %9 = vsyncpa [#allocation7], 0
    %10 = vsyncpa [#allocation5], 0
    // Predicated region
    $region2: #{tpu_custom_call.1} parent=1 // pred_check
      _
    $region3: #{tpu_custom_call.1} parent=1 // pred_check_branch
      %12 = sbr.rel (0) target = $region5
    $region4: #{tpu_custom_call.1} parent=1 // pred_region
      %s14 = ssub.s32 128, 128
      %15 = vsyncadd [#allocation4], %s14
      %s16 = sshll.u32 [#allocation3], 4
      %s17 = int_to_ptr.vmem [resolvable:$true] %s16
      %22 = dma.hbm_to_vmem [thread:$0]  %s0, 128, %s17, [#allocation4], 64, 64, 4
    $region5: #{tpu_custom_call.1} parent=1 // pred_fallthru
      _
    // Predicated region
    $region6: #{tpu_custom_call.1} parent=1 // pred_check
      _
    $region7: #{tpu_custom_call.1} parent=1 // pred_check_branch
      %24 = sbr.rel (0) target = $region9
    $region8: #{tpu_custom_call.1} parent=1 // pred_region
      %s26 = ssub.s32 1024, 1024
      %27 = vsyncadd [#allocation7], %s26
      %s28 = sshll.u32 [#allocation6], 4
      %s29 = int_to_ptr.vmem [resolvable:$true] %s28
      %34 = dma.hbm_to_vmem [thread:$0]  %s1, 1024, %s29, [#allocation7], 64, 64, 4
    $region9: #{tpu_custom_call.1} parent=1 // pred_fallthru
      _
    // Predicated region
    $region10: #{tpu_custom_call.1} parent=1 // pred_check
      _
    $region11: #{tpu_custom_call.1} parent=1 // pred_check_branch
      %36 = sbr.rel (0) target = $region13
    $region12: #{tpu_custom_call.1} parent=1 // pred_region
      %s38 = ssub.s32 1024, 1024
      %39 = vsyncadd [#allocation7], %s38
      %s40 = sshll.u32 [#allocation8], 4
      %s41 = int_to_ptr.vmem [resolvable:$true] %s40
      %46 = dma.hbm_to_vmem [thread:$0]  %s2, 1024, %s41, [#allocation7], 64, 64, 4
    $region13: #{tpu_custom_call.1} parent=1 // pred_fallthru
      _
    // Predicated region
    $region14: #{tpu_custom_call.1} parent=1 // pred_check
      _
    $region15: #{tpu_custom_call.1} parent=1 // pred_check_branch
      %48 = sbr.rel (0) target = $region17
    $region16: #{tpu_custom_call.1} parent=1 // pred_region
      %49 = dma.done [#allocation4], 128
    $region17: #{tpu_custom_call.1} parent=1 // pred_fallthru
      _
    // Predicated region
    $region18: #{tpu_custom_call.1} parent=1 // pred_check
      _
    $region19: #{tpu_custom_call.1} parent=1 // pred_check_branch
      %51 = sbr.rel (0) target = $region21
    $region20: #{tpu_custom_call.1} parent=1 // pred_region
      %52 = dma.done [#allocation7], 1024
    $region21: #{tpu_custom_call.1} parent=1 // pred_fallthru
      _
    // Predicated region
    $region22: #{tpu_custom_call.1} parent=1 // pred_check
      _
    $region23: #{tpu_custom_call.1} parent=1 // pred_check_branch
      %54 = sbr.rel (0) target = $region25
    $region24: #{tpu_custom_call.1} parent=1 // pred_region
      %55 = dma.done [#allocation7], 1024
    $region25: #{tpu_custom_call.1} parent=1 // pred_fallthru
      _
    %v57 = vld [vmem:[#allocation3] sm:$0xf]
    %v58 = vld [vmem:[#allocation3 + $0x4] sm:$0xf]
    %v59 = vld [vmem:[#allocation6] sm:$0xf]
    %v60 = vld [vmem:[#allocation6 + $0x4] sm:$0xf]
    %v61 = vld [vmem:[#allocation6 + $0x8] sm:$0xf]
    %v62 = vld [vmem:[#allocation6 + $0xc] sm:$0xf]
    %v63 = vld [vmem:[#allocation6 + $0x10] sm:$0xf]
    %v64 = vld [vmem:[#allocation6 + $0x14] sm:$0xf]
    %v65 = vld [vmem:[#allocation6 + $0x18] sm:$0xf]
    %v66 = vld [vmem:[#allocation6 + $0x1c] sm:$0xf]
    %v67 = vld [vmem:[#allocation6 + $0x20] sm:$0xf]
    %v68 = vld [vmem:[#allocation6 + $0x24] sm:$0xf]
    %v69 = vld [vmem:[#allocation6 + $0x28] sm:$0xf]
    %v70 = vld [vmem:[#allocation6 + $0x2c] sm:$0xf]
    %v71 = vld [vmem:[#allocation6 + $0x30] sm:$0xf]
    %v72 = vld [vmem:[#allocation6 + $0x34] sm:$0xf]
    %v73 = vld [vmem:[#allocation6 + $0x38] sm:$0xf]
    %v74 = vld [vmem:[#allocation6 + $0x3c] sm:$0xf]
    %v77 = vunpack.c.l.b16 %v57
    %v78 = vunpack.c.l.b16 %v58
    %v79 = vpack.c.b16 %v78, %v77
    %v97 = vunpack.c.l.b16 %v59
    %v98 = vunpack.c.l.b16 %v60
    %v99 = vunpack.c.l.b16 %v61
    %v100 = vunpack.c.l.b16 %v62
    %v101 = vunpack.c.l.b16 %v63
    %v102 = vunpack.c.l.b16 %v64
    %v103 = vunpack.c.l.b16 %v65
    %v104 = vunpack.c.l.b16 %v66
    %v105 = vunpack.c.l.b16 %v67
    %v106 = vunpack.c.l.b16 %v68
    %v107 = vunpack.c.l.b16 %v69
    %v108 = vunpack.c.l.b16 %v70
    %v109 = vunpack.c.l.b16 %v71
    %v110 = vunpack.c.l.b16 %v72
    %v111 = vunpack.c.l.b16 %v73
    %v112 = vunpack.c.l.b16 %v74
    %v113 = vpack.c.b16 %v98, %v97
    %v114 = vpack.c.b16 %v100, %v99
    %v115 = vpack.c.b16 %v102, %v101
    %v116 = vpack.c.b16 %v104, %v103
    %v117 = vpack.c.b16 %v106, %v105
    %v118 = vpack.c.b16 %v108, %v107
    %v119 = vpack.c.b16 %v110, %v109
    %v120 = vpack.c.b16 %v112, %v111
    %129 = vmatprep.subr.bf16.mxu0 0
    %130 = vmatpush1.bf16.msra.mxu0 %v113
    %131 = vmatprep.subr.bf16.mxu0 0
    %132 = vmatpush1.bf16.msra.mxu0 %v114
    %133 = vmatprep.subr.bf16.mxu0 0
    %134 = vmatpush1.bf16.msra.mxu0 %v115
    %135 = vmatprep.subr.bf16.mxu0 0
    %136 = vmatpush1.bf16.msra.mxu0 %v116
    %137 = vmatprep.subr.bf16.mxu0 0
    %138 = vmatpush1.bf16.msra.mxu0 %v117
    %139 = vmatprep.subr.bf16.mxu0 0
    %140 = vmatpush1.bf16.msra.mxu0 %v118
    %141 = vmatprep.subr.bf16.mxu0 0
    %142 = vmatpush1.bf16.msra.mxu0 %v119
    %143 = vmatprep.subr.bf16.mxu0 0
    %144 = vmatpush1.bf16.msra.mxu0 %v120
    %145 = vmatprep.subr.bf16.mxu0 0
    %146 = vmatpush1.bf16.msra.mxu0 0
    %147 = vmatprep.subr.bf16.mxu0 0
    %148 = vmatpush1.bf16.msra.mxu0 0
    %149 = vmatprep.subr.bf16.mxu0 0
    %150 = vmatpush1.bf16.msra.mxu0 0
    %151 = vmatprep.subr.bf16.mxu0 0
    %152 = vmatpush1.bf16.msra.mxu0 0
    %153 = vmatprep.subr.bf16.mxu0 0
    %154 = vmatpush1.bf16.msra.mxu0 0
    %155 = vmatprep.subr.bf16.mxu0 0
    %156 = vmatpush1.bf16.msra.mxu0 0
    %157 = vmatprep.subr.bf16.mxu0 0
    %158 = vmatpush1.bf16.msra.mxu0 0
    %159 = vmatprep.subr.bf16.mxu0 0
    %160 = vmatpush1.bf16.msra.mxu0 0
    %161 = vmatprep.mubr.bf16.mxu0 0
    %162 = vmatmul.mubr.bf16.gmra.mrb[0].mxu0 %v79
    %v163 = vpop.f32.mrb[0].mxu0
    %v164 = vadd.f32 0.0, %v163
    %v165 = vpop.f32.mrb[0].mxu0
    %v166 = vpop.f32.mrb[0].mxu0
    %v167 = vadd.f32 0.0, %v166
    %v168 = vpop.f32.mrb[0].mxu0
    %169 = vdwg.mxu0
    %v170 = vsub.f32 0.0, %v164
    %v171 = vmin.f32 %v170, 40.0
    %v172 = vmul.f32 %v171, 1.442695
    %v173 = vpow.pop %v172
    %v174 = vand.u32 2147483647, %v167
    %vm175 = vcmp.le.f32.partialorder %v174, 0.7853982
    %vm176 = vcmp.lt.s32.totalorder %v167, 0
    %v177 = vand.u32 %v167, 2139095040
    %v178 = vshrl.u32 %v177, 23
    %v179 = vsub.s32 %v178, 127
    %v180 = vand.u32 2147483647, %v167
    %v181 = vand.u32 %v180, 8388607
    %v182 = vor.u32 %v181, 8388608
    %v183 = vsub.s32 0, %v182
    %v184 = vadd.s32 %v179, 1
    %vm185 = vcmp.gt.s32.totalorder %v184, 0
    %v186 = vsel %vm185, %v184, 0
    %v187 = vshrl.u32 %v186, 5
    %v188 = vand.u32 %v186, 31
    %v189 = vsub.s32 32, %v188
    %v190 = vshrl.u32 683565275, %v189
    %v191 = vshll.u32 683565275, %v188
    %v192 = vshrl.u32 2475754826, %v189
    %v193 = vor.u32 %v191, %v192
    %v194 = vshll.u32 2475754826, %v188
    %v195 = vshrl.u32 2131351028, %v189
    %v196 = vor.u32 %v194, %v195
    %v197 = vshll.u32 2131351028, %v188
    %v198 = vshrl.u32 2102212464, %v189
    %v199 = vor.u32 %v197, %v198
    %v200 = vshll.u32 2102212464, %v188
    %v201 = vshrl.u32 920167782, %v189
    %v202 = vor.u32 %v200, %v201
    %v203 = vshll.u32 920167782, %v188
    %v204 = vshrl.u32 1326507024, %v189
    %v205 = vor.u32 %v203, %v204
    %vm206 = vcmp.lt.s32.totalorder %v187, 1
    %vm207 = vcmp.lt.s32.totalorder %v187, 2
    %vm208 = vcmp.lt.s32.totalorder %v187, 3
    %vm209 = vcmp.lt.s32.totalorder %v187, 4
    %v210 = vsel %vm206, %v190, %v193
    %v211 = vsel %vm209, %v199, 2102212464
    %v212 = vsel %vm208, %v196, %v211
    %v213 = vsel %vm207, %v210, %v212
    %v214 = vsel %vm206, %v193, %v196
    %v215 = vsel %vm209, %v202, 920167782
    %v216 = vsel %vm208, %v199, %v215
    %v217 = vsel %vm207, %v214, %v216
    %v218 = vsel %vm206, %v196, %v199
    %v219 = vsel %vm209, %v205, 1326507024
    %v220 = vsel %vm208, %v202, %v219
    %v221 = vsel %vm207, %v218, %v220
    %v222 = vshll.u32 %v182, 8
    %v223 = vmul.u32.u64.compose %v222, %v221
    %v224 = vextract.low.u32 %v223
    %v225 = vextract.high.u32 %v223
    %v226 = vmul.u32.u64.compose %v222, %v217
    %v227 = vextract.low.u32 %v226
    %v228 = vextract.high.u32 %v226
    %v229 = vmul.u32 %v222, %v213
    %v230 = vadd.s32 %v225, %v227
    %vm231 = vc.u32 %v225, %v227
    %v232 = vadd.s32 %v228, 1
    %v233 = vsel %vm231, %v232, %v228
    %v234 = vadd.s32 %v229, %v233
    %v235 = vadd.s32 %v234, 536870912
    %v236 = vshrl.u32 %v235, 30
    %v237 = vshll.u32 %v236, 30
    %v238 = vsub.s32 %v234, %v237
    %vm239 = vcmp.lt.s32.totalorder %v238, 0
    %v240 = vsub.s32 0, %v238
    %v241 = vsel %vm239, %v240, %v238
    %v242 = vclz %v241
    %v243 = vsub.s32 %v242, 2
    %vm244 = vcmp.gt.s32.totalorder 0, %v243
    %v245 = vsel %vm244, 0, %v243
    %v246 = vsub.s32 32, %v245
    %v247 = vshll.u32 %v238, %v245
    %v248 = vshrl.u32 %v230, %v246
    %v249 = vor.u32 %v247, %v248
    %v250 = vsub.s32 4294967266, %v245
    %v251 = vadd.s32 %v250, 127
    %v252 = vshll.u32 %v251, 23
    %v253 = vor.u32 4788187, %v252
    %v254 = vand.u32 2147483647, %v253
    %v256 = vcvt.s32.f32 %v249
    %v257 = vmul.f32 %v256, %v254
    %v258 = vxor.u32 %v257, 2147483648
    %v259 = vsel %vm176, %v258, %v257
    %v260 = vsub.s32 4, %v236
    %v261 = vsel %vm176, %v260, %v236
    %v262 = vsel %vm175, %v167, %v259
    %v263 = vsel %vm175, 0, %v261
    %v264 = vcosq.f32.pop %v262
    %v265 = vsinq.f32.pop %v262
    %vm266 = vweird.f32 %v167
    %v267 = vand.u32 %v263, 3
    %vm268 = vcmp.lt.s32.totalorder %v267, 2
    %vm269 = vcmp.eq.s32.totalorder %v267, 0
    %v270 = vxor.u32 %v265, 2147483648
    %v271 = vsel %vm269, %v264, %v270
    %vm272 = vcmp.eq.s32.totalorder %v267, 2
    %v273 = vxor.u32 %v264, 2147483648
    %v274 = vsel %vm272, %v273, %v265
    %v275 = vsel %vm268, %v271, %v274
    %v276 = vsel %vm266, nan, %v275
    %v277 = vmul.f32 %v173, %v276
    %v278 = vadd.f32 %v277, 1.0
    %v279 = vsub.f32 0.0, %v173
    %v280 = vand.u32 2147483647, %v167
    %vm281 = vcmp.le.f32.partialorder %v280, 0.7853982
    %vm282 = vcmp.lt.s32.totalorder %v167, 0
    %v283 = vand.u32 %v167, 2139095040
    %v284 = vshrl.u32 %v283, 23
    %v285 = vsub.s32 %v284, 127
    %v286 = vand.u32 2147483647, %v167
    %v287 = vand.u32 %v286, 8388607
    %v288 = vor.u32 %v287, 8388608
    %v289 = vsub.s32 0, %v288
    %v290 = vadd.s32 %v285, 1
    %vm291 = vcmp.gt.s32.totalorder %v290, 0
    %v292 = vsel %vm291, %v290, 0
    %v293 = vshrl.u32 %v292, 5
    %v294 = vand.u32 %v292, 31
    %v295 = vsub.s32 32, %v294
    %v296 = vshrl.u32 683565275, %v295
    %v297 = vshll.u32 683565275, %v294
    %v298 = vshrl.u32 2475754826, %v295
    %v299 = vor.u32 %v297, %v298
    %v300 = vshll.u32 2475754826, %v294
    %v301 = vshrl.u32 2131351028, %v295
    %v302 = vor.u32 %v300, %v301
    %v303 = vshll.u32 2131351028, %v294
    %v304 = vshrl.u32 2102212464, %v295
    %v305 = vor.u32 %v303, %v304
    %v306 = vshll.u32 2102212464, %v294
    %v307 = vshrl.u32 920167782, %v295
    %v308 = vor.u32 %v306, %v307
    %v309 = vshll.u32 920167782, %v294
    %v310 = vshrl.u32 1326507024, %v295
    %v311 = vor.u32 %v309, %v310
    %vm312 = vcmp.lt.s32.totalorder %v293, 1
    %vm313 = vcmp.lt.s32.totalorder %v293, 2
    %vm314 = vcmp.lt.s32.totalorder %v293, 3
    %vm315 = vcmp.lt.s32.totalorder %v293, 4
    %v316 = vsel %vm312, %v296, %v299
    %v317 = vsel %vm315, %v305, 2102212464
    %v318 = vsel %vm314, %v302, %v317
    %v319 = vsel %vm313, %v316, %v318
    %v320 = vsel %vm312, %v299, %v302
    %v321 = vsel %vm315, %v308, 920167782
    %v322 = vsel %vm314, %v305, %v321
    %v323 = vsel %vm313, %v320, %v322
    %v324 = vsel %vm312, %v302, %v305
    %v325 = vsel %vm315, %v311, 1326507024
    %v326 = vsel %vm314, %v308, %v325
    %v327 = vsel %vm313, %v324, %v326
    %v328 = vshll.u32 %v288, 8
    %v329 = vmul.u32.u64.compose %v328, %v327
    %v330 = vextract.low.u32 %v329
    %v331 = vextract.high.u32 %v329
    %v332 = vmul.u32.u64.compose %v328, %v323
    %v333 = vextract.low.u32 %v332
    %v334 = vextract.high.u32 %v332
    %v335 = vmul.u32 %v328, %v319
    %v336 = vadd.s32 %v331, %v333
    %vm337 = vc.u32 %v331, %v333
    %v338 = vadd.s32 %v334, 1
    %v339 = vsel %vm337, %v338, %v334
    %v340 = vadd.s32 %v335, %v339
    %v341 = vadd.s32 %v340, 536870912
    %v342 = vshrl.u32 %v341, 30
    %v343 = vshll.u32 %v342, 30
    %v344 = vsub.s32 %v340, %v343
    %vm345 = vcmp.lt.s32.totalorder %v344, 0
    %v346 = vsub.s32 0, %v344
    %v347 = vsel %vm345, %v346, %v344
    %v348 = vclz %v347
    %v349 = vsub.s32 %v348, 2
    %vm350 = vcmp.gt.s32.totalorder 0, %v349
    %v351 = vsel %vm350, 0, %v349
    %v352 = vsub.s32 32, %v351
    %v353 = vshll.u32 %v344, %v351
    %v354 = vshrl.u32 %v336, %v352
    %v355 = vor.u32 %v353, %v354
    %v356 = vsub.s32 4294967266, %v351
    %v357 = vadd.s32 %v356, 127
    %v358 = vshll.u32 %v357, 23
    %v359 = vor.u32 4788187, %v358
    %v360 = vand.u32 2147483647, %v359
    %v362 = vcvt.s32.f32 %v355
    %v363 = vmul.f32 %v362, %v360
    %v364 = vxor.u32 %v363, 2147483648
    %v365 = vsel %vm282, %v364, %v363
    %v366 = vsub.s32 4, %v342
    %v367 = vsel %vm282, %v366, %v342
    %v368 = vsel %vm281, %v167, %v365
    %v369 = vsel %vm281, 0, %v367
    %v370 = vcosq.f32.pop %v368
    %v371 = vsinq.f32.pop %v368
    %vm372 = vweird.f32 %v167
    %v373 = vadd.s32 %v369, 3
    %v374 = vand.u32 %v373, 3
    %vm375 = vcmp.lt.s32.totalorder %v374, 2
    %vm376 = vcmp.eq.s32.totalorder %v374, 0
    %v377 = vxor.u32 %v371, 2147483648
    %v378 = vsel %vm376, %v370, %v377
    %vm379 = vcmp.eq.s32.totalorder %v374, 2
    %v380 = vxor.u32 %v370, 2147483648
    %v381 = vsel %vm379, %v380, %v371
    %v382 = vsel %vm375, %v378, %v381
    %v383 = vsel %vm372, nan, %v382
    %v384 = vmul.f32 %v279, %v383
    %v385 = vmul.f32 %v278, %v278
    %v386 = vmul.f32 %v384, %v384
    %v387 = vadd.f32 %v385, %v386
    %v388 = vrcp.pop %v387
    %v389 = vmul.f32 %v164, %v278
    %v390 = vmul.f32 %v167, %v384
    %v391 = vadd.f32 %v389, %v390
    %v392 = vmul.f32 %v391, %v388
    %v393 = vpack.c.bf16 %v392, %v392
    %394 = vst [vmem:[#allocation2] sm:$0xf] %v393
    %v395 = vmul.f32 %v167, %v278
    %v396 = vmul.f32 %v164, %v384
    %v397 = vsub.f32 %v395, %v396
    %v398 = vmul.f32 %v397, %v388
    %v399 = vpack.c.bf16 %v398, %v398
    %s400 = scalar_lea.vmem [#allocation2], 4
    %401 = vst [vmem:[%s400] sm:$0xf] %v399
    %v402 = vld [vmem:[#allocation2] sm:$0xf]
    %v403 = vld [vmem:[#allocation2 + $0x4] sm:$0xf]
    %v404 = vld [vmem:[#allocation8] sm:$0xf]
    %v405 = vld [vmem:[#allocation8 + $0x4] sm:$0xf]
    %v406 = vld [vmem:[#allocation8 + $0x8] sm:$0xf]
    %v407 = vld [vmem:[#allocation8 + $0xc] sm:$0xf]
    %v408 = vld [vmem:[#allocation8 + $0x10] sm:$0xf]
    %v409 = vld [vmem:[#allocation8 + $0x14] sm:$0xf]
    %v410 = vld [vmem:[#allocation8 + $0x18] sm:$0xf]
    %v411 = vld [vmem:[#allocation8 + $0x1c] sm:$0xf]
    %v412 = vld [vmem:[#allocation8 + $0x20] sm:$0xf]
    %v413 = vld [vmem:[#allocation8 + $0x24] sm:$0xf]
    %v414 = vld [vmem:[#allocation8 + $0x28] sm:$0xf]
    %v415 = vld [vmem:[#allocation8 + $0x2c] sm:$0xf]
    %v416 = vld [vmem:[#allocation8 + $0x30] sm:$0xf]
    %v417 = vld [vmem:[#allocation8 + $0x34] sm:$0xf]
    %v418 = vld [vmem:[#allocation8 + $0x38] sm:$0xf]
    %v419 = vld [vmem:[#allocation8 + $0x3c] sm:$0xf]
    %v422 = vunpack.c.l.b16 %v402
    %v423 = vunpack.c.l.b16 %v403
    %v424 = vpack.c.b16 %v423, %v422
    %v442 = vunpack.c.l.b16 %v404
    %v443 = vunpack.c.l.b16 %v405
    %v444 = vunpack.c.l.b16 %v406
    %v445 = vunpack.c.l.b16 %v407
    %v446 = vunpack.c.l.b16 %v408
    %v447 = vunpack.c.l.b16 %v409
    %v448 = vunpack.c.l.b16 %v410
    %v449 = vunpack.c.l.b16 %v411
    %v450 = vunpack.c.l.b16 %v412
    %v451 = vunpack.c.l.b16 %v413
    %v452 = vunpack.c.l.b16 %v414
    %v453 = vunpack.c.l.b16 %v415
    %v454 = vunpack.c.l.b16 %v416
    %v455 = vunpack.c.l.b16 %v417
    %v456 = vunpack.c.l.b16 %v418
    %v457 = vunpack.c.l.b16 %v419
    %v458 = vpack.c.b16 %v443, %v442
    %v459 = vpack.c.b16 %v445, %v444
    %v460 = vpack.c.b16 %v447, %v446
    %v461 = vpack.c.b16 %v449, %v448
    %v462 = vpack.c.b16 %v451, %v450
    %v463 = vpack.c.b16 %v453, %v452
    %v464 = vpack.c.b16 %v455, %v454
    %v465 = vpack.c.b16 %v457, %v456
    %474 = vmatprep.subr.bf16.mxu0 0
    %475 = vmatpush1.bf16.msra.mxu0 %v458
    %476 = vmatprep.subr.bf16.mxu0 0
    %477 = vmatpush1.bf16.msra.mxu0 %v459
    %478 = vmatprep.subr.bf16.mxu0 0
    %479 = vmatpush1.bf16.msra.mxu0 %v460
    %480 = vmatprep.subr.bf16.mxu0 0
    %481 = vmatpush1.bf16.msra.mxu0 %v461
    %482 = vmatprep.subr.bf16.mxu0 0
    %483 = vmatpush1.bf16.msra.mxu0 %v462
    %484 = vmatprep.subr.bf16.mxu0 0
    %485 = vmatpush1.bf16.msra.mxu0 %v463
    %486 = vmatprep.subr.bf16.mxu0 0
    %487 = vmatpush1.bf16.msra.mxu0 %v464
    %488 = vmatprep.subr.bf16.mxu0 0
    %489 = vmatpush1.bf16.msra.mxu0 %v465
    %490 = vmatprep.subr.bf16.mxu0 0
    %491 = vmatpush1.bf16.msra.mxu0 0
    %492 = vmatprep.subr.bf16.mxu0 0
    %493 = vmatpush1.bf16.msra.mxu0 0
    %494 = vmatprep.subr.bf16.mxu0 0
    %495 = vmatpush1.bf16.msra.mxu0 0
    %496 = vmatprep.subr.bf16.mxu0 0
    %497 = vmatpush1.bf16.msra.mxu0 0
    %498 = vmatprep.subr.bf16.mxu0 0
    %499 = vmatpush1.bf16.msra.mxu0 0
    %500 = vmatprep.subr.bf16.mxu0 0
    %501 = vmatpush1.bf16.msra.mxu0 0
    %502 = vmatprep.subr.bf16.mxu0 0
    %503 = vmatpush1.bf16.msra.mxu0 0
    %504 = vmatprep.subr.bf16.mxu0 0
    %505 = vmatpush1.bf16.msra.mxu0 0
    %506 = vmatprep.mubr.bf16.mxu0 0
    %507 = vmatmul.mubr.bf16.gmra.mrb[0].mxu0 %v424
    %v508 = vpop.f32.mrb[0].mxu0
    %v509 = vadd.f32 0.0, %v508
    %v510 = vpop.f32.mrb[0].mxu0
    %v511 = vpop.f32.mrb[0].mxu0
    %v512 = vadd.f32 0.0, %v511
    %v513 = vpop.f32.mrb[0].mxu0
    %514 = vdwg.mxu0
    %515 = vst [vmem:[#allocation9] sm:$0xff] %v509
    %516 = vst [vmem:[#allocation9 + $0x8] sm:$0xff] %v512
    // Predicated region
    $region26: #{tpu_custom_call.1} parent=1 // pred_check
      _
    $region27: #{tpu_custom_call.1} parent=1 // pred_check_branch
      %518 = sbr.rel (0) target = $region29
    $region28: #{tpu_custom_call.1} parent=1 // pred_region
      %s520 = ssub.s32 256, 256
      %521 = vsyncadd [#allocation5], %s520
      %s522 = sshll.u32 [#allocation9], 4
      %s523 = int_to_ptr.vmem [resolvable:$true] %s522
      %528 = dma.vmem_to_hbm [thread:$0]  %s523, 256, %s3, [#allocation5], 128, 128, 8
    $region29: #{tpu_custom_call.1} parent=1 // pred_fallthru
      _
    // Predicated region
    $region30: #{tpu_custom_call.1} parent=1 // pred_check
      _
    $region31: #{tpu_custom_call.1} parent=1 // pred_check_branch
      %530 = sbr.rel (0) target = $region33
    $region32: #{tpu_custom_call.1} parent=1 // pred_region
      %531 = dma.done [#allocation5], 256
    $region33: #{tpu_custom_call.1} parent=1 // pred_fallthru
      _
    %532 = vsyncpa [#allocation4], 1
    %533 = vsyncpa [#allocation7], 1
    %534 = vsyncpa [#allocation5], 1

</llo_original>
